<compile_context>
chip_gen: v5e
topology: v5e:2x2
jax: 0.10.0
libtpu: 0.0.40
codegen_flags: <defaults>
</compile_context>

<pallas_src>
import functools
import math

import jax
import jax.numpy as jnp
import numpy as np
from jax.experimental import pallas as pl
from jax.experimental.pallas import tpu as pltpu


def _dct2_ortho_matrix_T(N: int) -> np.ndarray:
    """Return D^T (N, N) s.t. frames @ D^T == DCT-II(frames, norm='ortho')."""
    n = np.arange(N, dtype=np.float64)
    k = np.arange(N, dtype=np.float64)
    # D[k, n] = cos(pi/N * (n + 0.5) * k) * scale(k)
    D = np.cos(np.pi / N * np.outer(k, n + 0.5))
    scale = np.full((N, 1), math.sqrt(2.0 / N), dtype=np.float64)
    scale[0, 0] = math.sqrt(1.0 / N)
    D = D * scale
    return np.ascontiguousarray(D.T).astype(np.float32)


@functools.lru_cache(maxsize=None)
def _block_dct_basis_np(hop_length: int, pack: int) -> np.ndarray:
    """Block-diagonal basis kron(I_pack, D^T): (pack*hop, pack*hop) float32.

    A packed row [f0 | f1 | ... | f_{pack-1}] @ basis applies the DCT-II
    independently to each hop-length sub-segment.
    """
    d_t = _dct2_ortho_matrix_T(hop_length)
    return np.kron(np.eye(pack, dtype=np.float32), d_t).astype(np.float32)


def _dct_matmul_kernel(x_ref, d_ref, o_ref):
    # One (tm, W) tile of packed frames times the resident (W, W) DCT basis.
    o_ref[...] = jnp.dot(
        x_ref[...], d_ref[...], preferred_element_type=jnp.float32
    ).astype(o_ref.dtype)


def _pallas_packed_dct(packed: jax.Array, basis: jax.Array, tm: int) -> jax.Array:
    """packed: (R, W) float32, basis: (W, W) float32. Returns (R, W)."""
    R, W = packed.shape
    tm_eff = min(tm, R)                      # R is always a multiple of 8
    grid = (pl.cdiv(R, tm_eff),)             # ragged last block handled by Pallas
    return pl.pallas_call(
        _dct_matmul_kernel,
        out_shape=jax.ShapeDtypeStruct((R, W), jnp.float32),
        grid_spec=pltpu.PrefetchScalarGridSpec(
            num_scalar_prefetch=0,
            grid=grid,
            in_specs=[
                pl.BlockSpec((tm_eff, W), lambda i: (i, 0)),
                pl.BlockSpec((W, W), lambda i: (0, 0)),  # constant basis, DMA hoisted
            ],
            out_specs=pl.BlockSpec((tm_eff, W), lambda i: (i, 0)),
        ),
        compiler_params=pltpu.CompilerParams(
            dimension_semantics=("parallel",),
        ),
    )(packed, basis)


@functools.partial(jax.jit, static_argnames=("hop_length", "pack", "tm"))
def dct_forward(x: jax.Array, hop_length: int, pack: int = 8, tm: int = 1024) -> jax.Array:
    """Mirrors DCT.forward: pad last dim, unfold into hop_length frames,
    DCT-II (norm='ortho') along the frame axis.
    Output shape: x.shape[:-1] + (num_frames, hop_length)."""
    x = x.astype(jnp.float32)
    x_len = x.shape[-1]
    pad_len = hop_length - x_len % hop_length  # full extra zero frame if divisible (matches PyTorch module)
    x = jnp.pad(x, [(0, 0)] * (x.ndim - 1) + [(0, pad_len)])
    num_frames = x.shape[-1] // hop_length
    out_shape = x.shape[:-1] + (num_frames, hop_length)

    # Pack `pack` consecutive frames per row -> lane-dense (R, pack*hop) slab.
    total = int(np.prod(out_shape))
    W = pack * hop_length                     # 128 for hop=16, pack=8
    R = -(-total // W)
    R = ((R + 7) // 8) * 8                    # sublane-align the row count
    flat = x.reshape(-1)
    if R * W != total:
        # <= 1023 elements of zero padding; fuses with the time pad under jit.
        flat = jnp.pad(flat, [(0, R * W - total)])
    packed = flat.reshape(R, W)

    basis = jnp.asarray(_block_dct_basis_np(hop_length, pack))  # jit constant, cached on host

    out_packed = _pallas_packed_dct(packed, basis, tm)

    out_flat = out_packed.reshape(-1)
    if R * W != total:
        out_flat = out_flat[:total]
    return out_flat.reshape(out_shape)


if __name__ == "__main__":
    hop_length = 16
    B, C, L = 2, 4, 60  # pad_len = 4 -> 4 frames of 16

    key = jax.random.PRNGKey(0)
    x = jax.random.normal(key, (B, C, L), dtype=jnp.float32)

    out = dct_forward(x, hop_length)
    out = jax.block_until_ready(out)

    # Reference check in plain JAX (same math, no Pallas).
    pad_len = hop_length - L % hop_length
    x_pad = jnp.pad(x, ((0, 0), (0, 0), (0, pad_len)))
    frames_ref = x_pad.reshape(B, C, -1, hop_length)
    ref = jnp.einsum(
        "bcfn,nk->bcfk", frames_ref, jnp.asarray(_dct2_ortho_matrix_T(hop_length))
    )
    assert out.shape == (B, C, L // hop_length + 1, hop_length)
    assert np.allclose(np.asarray(out), np.asarray(ref), atol=1e-4, rtol=1e-4)

    print("KERNEL_OK")
</pallas_src>

<mosaic_0001>
module attributes {stable_mosaic.version = 11 : i64} {
  func.func @_dct_matmul_kernel(%arg0: i32, %arg1: memref<8x128xf32, #tpu.memory_space<vmem>>, %arg2: memref<128x128xf32, #tpu.memory_space<vmem>>, %arg3: memref<8x128xf32, #tpu.memory_space<vmem>>) attributes {dimension_semantics = [#tpu.dimension_semantics<parallel>], iteration_bounds = array<i64: 1>, scalar_prefetch = 0 : i64, scratch_operands = 0 : i64, tpu.core_type = #tpu.core_type<tc>, window_params = [{transform_indices = @transform_0, window_bounds = array<i64: 8, 128>}, {pipeline_mode = #tpu.pipeline_mode<synchronous>, transform_indices = @transform_1, window_bounds = array<i64: 128, 128>}, {transform_indices = @transform_2, window_bounds = array<i64: 8, 128>}]} {
    %c0 = arith.constant 0 : index
    %c0_0 = arith.constant 0 : index
    %0 = vector.load %arg1[%c0, %c0_0] : memref<8x128xf32, #tpu.memory_space<vmem>>, vector<8x128xf32>
    %c0_1 = arith.constant 0 : index
    %c0_2 = arith.constant 0 : index
    %1 = vector.load %arg2[%c0_1, %c0_2] : memref<128x128xf32, #tpu.memory_space<vmem>>, vector<128x128xf32>
    %cst = arith.constant dense<0.000000e+00> : vector<8x128xf32>
    %2 = tpu.matmul %0, %1, %cst {dimension_numbers = #tpu.dot_dimension_numbers<[1], [0], [0], [1], [0, 0, 1, 1], [], []>} : vector<8x128xf32>, vector<128x128xf32>, vector<8x128xf32> -> vector<8x128xf32>
    %c0_3 = arith.constant 0 : index
    %c0_4 = arith.constant 0 : index
    %3 = vector.load %arg3[%c0_3, %c0_4] : memref<8x128xf32, #tpu.memory_space<vmem>>, vector<8x128xf32>
    tpu.vector_store %arg3[%c0_3, %c0_4], %2 {strides = array<i32>} : memref<8x128xf32, #tpu.memory_space<vmem>>, vector<8x128xf32>,
    return
  }
  func.func @transform_0(%arg0: i32) -> (i32, i32) {
    %c0_i32 = arith.constant 0 : i32
    %c0_i32_0 = arith.constant 0 : i32
    return %arg0, %c0_i32 : i32, i32
  }
  func.func @transform_1(%arg0: i32) -> (i32, i32) {
    %c0_i32 = arith.constant 0 : i32
    %c0_i32_0 = arith.constant 0 : i32
    %c0_i32_1 = arith.constant 0 : i32
    return %c0_i32, %c0_i32_0 : i32, i32
  }
  func.func @transform_2(%arg0: i32) -> (i32, i32) {
    %c0_i32 = arith.constant 0 : i32
    %c0_i32_0 = arith.constant 0 : i32
    return %arg0, %c0_i32 : i32, i32
  }
}

</mosaic_0001>

<llo_original>
// kernel: dct_forward.1
$region0: #{dct_forward.1}
  #allocation0 [shape = 'u32[]', space=smem, size = 0x4, offset = 0x4, fixed_abs, tag = 'smem constant byte address 0x4 - core index']
  #allocation1 [shape = 'u32[72,128]{1,0:T(1,128)}', space=vmem, size = 0x9000, scoped, tag = 'internal scratch']
  %s0 = inlined_call_operand.vmem [shape: f32[8,128], index: 0, kind: input, shape index: {}]
  %s1 = inlined_call_operand.hbm [shape: f32[128,128], index: 1, kind: input, shape index: {}]
  %s2 = inlined_call_operand.vmem [shape: f32[8,128], index: 2, kind: output, shape index: {}]
  %s3 = sld [smem:[#allocation0]]
  $region22: #{dct_forward.1} parent=0
    _
  %s5 = ssub.s32 1, %s3
  %s6 = scalar_select 0, %s5, %s3
  $region1: #{dct_forward.1} parent=0
    #allocation2 [shape = 'u8[65536]{0}', space=vmem, size = 0x10000, scoped, tag = 'input window, operand 1, single buffered']
    #allocation3 [shape = 's32[1]{0}', space=sflag, size = 0x4, scoped, tag = 'scoped memory for dct_forward.1']
    %7 = vsyncpa [#allocation3], 0
    // Predicated region
    $region2: #{dct_forward.1} parent=1 // pred_check
      _
    $region3: #{dct_forward.1} parent=1 // pred_check_branch
      %9 = sbr.rel (0) target = $region5
    $region4: #{dct_forward.1} parent=1 // pred_region
      _
    $region5: #{dct_forward.1} parent=1 // pred_fallthru
      _
    // Predicated region
    $region6: #{dct_forward.1} parent=1 // pred_check
      _
    $region7: #{dct_forward.1} parent=1 // pred_check_branch
      %11 = sbr.rel (0) target = $region9
    $region8: #{dct_forward.1} parent=1 // pred_region
      %13 = vsyncadd [#allocation3], 0
      %s14 = sshll.u32 %s1, 4
      %s15 = int_to_ptr.hbm [resolvable:$true] %s14
      %s16 = sshll.u32 [#allocation2], 4
      %s17 = int_to_ptr.vmem [resolvable:$true] %s16
      %22 = dma.hbm_to_vmem [thread:$0]  %s15, 2048, %s17, [#allocation3], 128, 128, 8
    $region9: #{dct_forward.1} parent=1 // pred_fallthru
      _
    // Predicated region
    $region10: #{dct_forward.1} parent=1 // pred_check
      _
    $region11: #{dct_forward.1} parent=1 // pred_check_branch
      %24 = sbr.rel (0) target = $region13
    $region12: #{dct_forward.1} parent=1 // pred_region
      %26 = dma.done [#allocation3], 2048
    $region13: #{dct_forward.1} parent=1 // pred_fallthru
      _
    %v27 = vld [vmem:[%s0] sm:$0xff]
    %v28 = vld [vmem:[#allocation2] sm:$0xff]
    %v29 = vld [vmem:[#allocation2 + $0x8] sm:$0xff]
    %v30 = vld [vmem:[#allocation2 + $0x10] sm:$0xff]
    %v31 = vld [vmem:[#allocation2 + $0x18] sm:$0xff]
    %v32 = vld [vmem:[#allocation2 + $0x20] sm:$0xff]
    %v33 = vld [vmem:[#allocation2 + $0x28] sm:$0xff]
    %v34 = vld [vmem:[#allocation2 + $0x30] sm:$0xff]
    %v35 = vld [vmem:[#allocation2 + $0x38] sm:$0xff]
    %v36 = vld [vmem:[#allocation2 + $0x40] sm:$0xff]
    %v37 = vld [vmem:[#allocation2 + $0x48] sm:$0xff]
    %v38 = vld [vmem:[#allocation2 + $0x50] sm:$0xff]
    %v39 = vld [vmem:[#allocation2 + $0x58] sm:$0xff]
    %v40 = vld [vmem:[#allocation2 + $0x60] sm:$0xff]
    %v41 = vld [vmem:[#allocation2 + $0x68] sm:$0xff]
    %v42 = vld [vmem:[#allocation2 + $0x70] sm:$0xff]
    %v43 = vld [vmem:[#allocation2 + $0x78] sm:$0xff]
    %44 = vmatpush.msra.mxu0 %v43
    %45 = vmatpush.msra.mxu0 %v42
    %46 = vmatpush.msra.mxu0 %v41
    %47 = vmatpush.msra.mxu0 %v40
    %48 = vmatpush.msra.mxu0 %v39
    %49 = vmatpush.msra.mxu0 %v38
    %50 = vmatpush.msra.mxu0 %v37
    %51 = vmatpush.msra.mxu0 %v36
    %52 = vmatpush.msra.mxu0 %v35
    %53 = vmatpush.msra.mxu0 %v34
    %54 = vmatpush.msra.mxu0 %v33
    %55 = vmatpush.msra.mxu0 %v32
    %56 = vmatpush.msra.mxu0 %v31
    %57 = vmatpush.msra.mxu0 %v30
    %58 = vmatpush.msra.mxu0 %v29
    %59 = vmatpush.msra.mxu0 %v28
    %60 = vmatmul.f32.gmra.mxu0 %v27
    %v61 = vpop.f32.mrf.mxu0
    %v62 = vadd.f32 0.0, %v61
    %63 = vdwg.mxu0
    %64 = vst [vmem:[%s2] sm:$0xff] %v62
    // Predicated region
    $region14: #{dct_forward.1} parent=1 // pred_check
      _
    $region15: #{dct_forward.1} parent=1 // pred_check_branch
      %66 = sbr.rel (0) target = $region17
    $region16: #{dct_forward.1} parent=1 // pred_region
      _
    $region17: #{dct_forward.1} parent=1 // pred_fallthru
      _
    // Predicated region
    $region18: #{dct_forward.1} parent=1 // pred_check
      _
    $region19: #{dct_forward.1} parent=1 // pred_check_branch
      %68 = sbr.rel (0) target = $region21
    $region20: #{dct_forward.1} parent=1 // pred_region
      _
    $region21: #{dct_forward.1} parent=1 // pred_fallthru
      _
    %69 = vsyncpa [#allocation3], 1

</llo_original>
